<compile_context>
chip_gen: v7x
topology: tpu7x:2x2x1
jax: 0.10.0
libtpu: 0.0.40
codegen_flags: <defaults>
</compile_context>

<pallas_src>
import functools

import jax
import jax.numpy as jnp
from jax.experimental import pallas as pl
from jax.experimental.pallas import tpu as pltpu

_LANE = 128
_SUBLANE = 8


def _cdiv(a, b):
    return -(-a // b)


def _round_up(x, m):
    return _cdiv(x, m) * m


# ---------------------------------------------------------------------------
# Kernel body
# ---------------------------------------------------------------------------
def _actor_kernel(x_ref, w1_ref, b1_ref, w2_ref, b2_ref, w3_ref, b3_ref,
                  o_ref, *, max_action):
    # Layer 1: Linear + ReLU (MXU matmul, f32 accumulation).
    h1 = jnp.dot(x_ref[...], w1_ref[...], preferred_element_type=jnp.float32)
    h1 = jnp.maximum(h1 + b1_ref[...], 0.0)

    # Layer 2: Linear + ReLU.
    h2 = jnp.dot(h1.astype(w2_ref.dtype), w2_ref[...],
                 preferred_element_type=jnp.float32)
    h2 = jnp.maximum(h2 + b2_ref[...], 0.0)

    # Layer 3: Linear + tanh epilogue (tanh in f32 -> EUP slot).
    h3 = jnp.dot(h2.astype(w3_ref.dtype), w3_ref[...],
                 preferred_element_type=jnp.float32)
    h3 = h3 + b3_ref[...]
    o_ref[...] = (max_action * jnp.tanh(h3)).astype(o_ref.dtype)


# ---------------------------------------------------------------------------
# One-time parameter preparation (do this when params are created / updated).
# ---------------------------------------------------------------------------
def prepare_params(params, *, compute_dtype=jnp.bfloat16):
    """Pad / cast / reshape weights once so actor_forward does no per-call
    weight work. Re-run whenever the underlying parameters change."""
    state_dim, hidden_dim = params["w1"].shape
    action_dim = params["w3"].shape[1]
    k_pad = _round_up(state_dim, _SUBLANE)     # layer-1 K, sublane-aligned
    out_pad = _round_up(action_dim, _LANE)     # lane-dense output slab

    w1 = jnp.pad(params["w1"], ((0, k_pad - state_dim), (0, 0)))
    w3 = jnp.pad(params["w3"], ((0, 0), (0, out_pad - action_dim)))
    b3 = jnp.pad(params["b3"], (0, out_pad - action_dim))

    return {
        "w1": w1.astype(compute_dtype),
        "w2": params["w2"].astype(compute_dtype),
        "w3": w3.astype(compute_dtype),
        # Biases stay (1, N) f32: they broadcast over the batch tile and add
        # straight onto the f32 accumulators.
        "b1": params["b1"].reshape(1, -1).astype(jnp.float32),
        "b2": params["b2"].reshape(1, -1).astype(jnp.float32),
        "b3": b3.reshape(1, -1).astype(jnp.float32),
        "state_dim": state_dim,
        "hidden_dim": hidden_dim,
        "action_dim": action_dim,
        "k_pad": k_pad,
        "out_pad": out_pad,
        "compute_dtype": compute_dtype,
    }


def _resident_spec(shape, single_buffer):
    """Weight/bias spec: constant index_map (VMEM-resident across grid steps);
    single-buffered when supported to halve resident VMEM."""
    index_map = lambda i: (0, 0)
    if single_buffer:
        return pl.BlockSpec(shape, index_map, pipeline_mode=pl.Buffered(1))
    return pl.BlockSpec(shape, index_map)


# ---------------------------------------------------------------------------
# Forward wrapper
# ---------------------------------------------------------------------------
def actor_forward(state, prepared, max_action, *, block_b=None, out_dtype=None):
    """state: (B, state_dim). prepared: output of prepare_params().

    Returns (B, action_dim) actions = max_action * tanh(MLP(state)).
    """
    B, state_dim = state.shape
    assert state_dim == prepared["state_dim"]
    hidden_dim = prepared["hidden_dim"]
    action_dim = prepared["action_dim"]
    k_pad = prepared["k_pad"]
    out_pad = prepared["out_pad"]
    compute_dtype = prepared["compute_dtype"]
    out_dtype = state.dtype if out_dtype is None else out_dtype

    if block_b is None:
        # bf16 intermediates tolerate bigger tiles; f32 at 512 rows spills.
        block_b = 512 if compute_dtype == jnp.bfloat16 else 256

    # Evenly split the batch into sublane-aligned tiles. Keep >= 2 grid steps
    # whenever possible so the "parallel" axis can feed both v7x TensorCores
    # (extra step overhead is ~0.35 us; weights never re-DMA).
    n_tiles = _cdiv(B, block_b)
    if B > _SUBLANE:
        n_tiles = max(n_tiles, 2)
    tb = _round_up(_cdiv(B, n_tiles), _SUBLANE)
    b_pad = n_tiles * tb

    x = state
    if b_pad != B or k_pad != state_dim:
        x = jnp.pad(x, ((0, b_pad - B), (0, k_pad - state_dim)))
    x = x.astype(compute_dtype)

    weights = (prepared["w1"], prepared["b1"], prepared["w2"],
               prepared["b2"], prepared["w3"], prepared["b3"])

    # --- VMEM budget: streamed tiles (double-buffered) + weights + headroom --
    def _nbytes(a):
        return a.size * a.dtype.itemsize

    stream_bytes = 2 * tb * (k_pad * jnp.dtype(compute_dtype).itemsize
                             + out_pad * jnp.dtype(out_dtype).itemsize)
    weight_bytes = sum(_nbytes(w) for w in weights)
    interm_bytes = 2 * tb * hidden_dim * 4        # h1 / h2 f32 intermediates
    vmem_limit = int(1.5 * (stream_bytes + 2 * weight_bytes + interm_bytes))
    vmem_limit = min(max(vmem_limit, 32 << 20), 64 << 20)

    cost = pl.CostEstimate(
        flops=2 * b_pad * (k_pad * hidden_dim + hidden_dim * hidden_dim
                           + hidden_dim * out_pad),
        transcendentals=b_pad * out_pad,
        bytes_accessed=int(weight_bytes + _nbytes(x)
                           + b_pad * out_pad * jnp.dtype(out_dtype).itemsize),
    )

    kernel = functools.partial(_actor_kernel, max_action=float(max_action))
    out_shape = jax.ShapeDtypeStruct((b_pad, out_pad), out_dtype)

    def _run(single_buffer):
        return pl.pallas_call(
            kernel,
            out_shape=out_shape,
            grid=(n_tiles,),
            in_specs=[
                pl.BlockSpec((tb, k_pad), lambda i: (i, 0)),              # x streams
                _resident_spec((k_pad, hidden_dim), single_buffer),       # w1
                _resident_spec((1, hidden_dim), single_buffer),           # b1
                _resident_spec((hidden_dim, hidden_dim), single_buffer),  # w2
                _resident_spec((1, hidden_dim), single_buffer),           # b2
                _resident_spec((hidden_dim, out_pad), single_buffer),     # w3
                _resident_spec((1, out_pad), single_buffer),              # b3
            ],
            out_specs=pl.BlockSpec((tb, out_pad), lambda i: (i, 0)),
            compiler_params=pltpu.CompilerParams(
                dimension_semantics=("parallel",),
                vmem_limit_bytes=vmem_limit),
            cost_estimate=cost,
        )(x, *weights)

    try:
        out = _run(single_buffer=hasattr(pl, "Buffered"))
    except Exception:  # pragma: no cover — backend rejects Buffered(1)
        out = _run(single_buffer=False)

    return out[:B, :action_dim]


# ---------------------------------------------------------------------------
# Reference + synthetic init
# ---------------------------------------------------------------------------
def _reference_forward(state, params, max_action):
    a = jnp.maximum(state @ params["w1"] + params["b1"], 0.0)
    a = jnp.maximum(a @ params["w2"] + params["b2"], 0.0)
    return max_action * jnp.tanh(a @ params["w3"] + params["b3"])


def init_params(key, state_dim, action_dim, hidden_dim):
    """Deterministic synthetic init (PyTorch-style uniform fan-in bounds)."""
    ks = jax.random.split(key, 6)

    def linear(kw, kb, fan_in, fan_out):
        bound = 1.0 / jnp.sqrt(fan_in)
        w = jax.random.uniform(kw, (fan_in, fan_out), jnp.float32, -bound, bound)
        b = jax.random.uniform(kb, (fan_out,), jnp.float32, -bound, bound)
        return w, b

    w1, b1 = linear(ks[0], ks[1], state_dim, hidden_dim)
    w2, b2 = linear(ks[2], ks[3], hidden_dim, hidden_dim)
    w3, b3 = linear(ks[4], ks[5], hidden_dim, action_dim)
    return {"w1": w1, "b1": b1, "w2": w2, "b2": b2, "w3": w3, "b3": b3}


if __name__ == "__main__":
    key = jax.random.PRNGKey(0)
    k_params, k_state, k_state2 = jax.random.split(key, 3)

    state_dim, action_dim, hidden_dim = 16, 4, 32
    max_action = 2.0

    params = init_params(k_params, state_dim, action_dim, hidden_dim)

    # Small batch, single tile.
    state = jax.random.normal(k_state, (2, state_dim), dtype=jnp.float32)
    ref = _reference_forward(state, params, max_action)

    # Default bf16-operand / f32-accumulate path (v6e/v7x MXU fast path).
    prep_bf16 = prepare_params(params)                     # bf16 by default
    out_bf16 = actor_forward(state, prep_bf16, max_action)
    jax.block_until_ready(out_bf16)
    assert out_bf16.shape == (2, action_dim)
    assert out_bf16.dtype == state.dtype
    assert jnp.allclose(out_bf16, ref, atol=1e-1, rtol=1e-1)

    # Explicit f32 path: near-exact match with the reference.
    prep_f32 = prepare_params(params, compute_dtype=jnp.float32)
    out_f32 = actor_forward(state, prep_f32, max_action)
    jax.block_until_ready(out_f32)
    assert out_f32.shape == (2, action_dim)
    assert jnp.allclose(out_f32, ref, atol=1e-5, rtol=1e-5)

    # Non-tile-multiple batch: exercises the multi-step parallel grid plus
    # row/column padding and the even-split tb policy.
    state2 = jax.random.normal(k_state2, (24, state_dim), dtype=jnp.float32)
    ref2 = _reference_forward(state2, params, max_action)
    out2 = actor_forward(state2, prep_f32, max_action, block_b=16)
    jax.block_until_ready(out2)
    assert out2.shape == (24, action_dim)
    assert jnp.allclose(out2, ref2, atol=1e-5, rtol=1e-5)

    print("KERNEL_OK")
</pallas_src>

<mosaic_0001>
module attributes {stable_mosaic.version = 11 : i64} {
  func.func @_actor_kernel(%arg0: i32, %arg1: memref<8x16xbf16, #tpu.memory_space<vmem>>, %arg2: memref<16x32xbf16, #tpu.memory_space<vmem>>, %arg3: memref<1x32xf32, #tpu.memory_space<vmem>>, %arg4: memref<32x32xbf16, #tpu.memory_space<vmem>>, %arg5: memref<1x32xf32, #tpu.memory_space<vmem>>, %arg6: memref<32x128xbf16, #tpu.memory_space<vmem>>, %arg7: memref<1x128xf32, #tpu.memory_space<vmem>>, %arg8: memref<8x128xf32, #tpu.memory_space<vmem>>) attributes {dimension_semantics = [#tpu.dimension_semantics<parallel>], iteration_bounds = array<i64: 1>, scalar_prefetch = 0 : i64, scratch_operands = 0 : i64, tpu.core_type = #tpu.core_type<tc>, window_params = [{transform_indices = @transform_0, window_bounds = array<i64: 8, 16>}, {pipeline_mode = #tpu.pipeline_mode<synchronous>, transform_indices = @transform_1, window_bounds = array<i64: 16, 32>}, {pipeline_mode = #tpu.pipeline_mode<synchronous>, transform_indices = @transform_2, window_bounds = array<i64: 1, 32>}, {pipeline_mode = #tpu.pipeline_mode<synchronous>, transform_indices = @transform_3, window_bounds = array<i64: 32, 32>}, {pipeline_mode = #tpu.pipeline_mode<synchronous>, transform_indices = @transform_4, window_bounds = array<i64: 1, 32>}, {pipeline_mode = #tpu.pipeline_mode<synchronous>, transform_indices = @transform_5, window_bounds = array<i64: 32, 128>}, {pipeline_mode = #tpu.pipeline_mode<synchronous>, transform_indices = @transform_6, window_bounds = array<i64: 1, 128>}, {transform_indices = @transform_7, window_bounds = array<i64: 8, 128>}]} {
    %c0 = arith.constant 0 : index
    %c0_0 = arith.constant 0 : index
    %0 = vector.load %arg1[%c0, %c0_0] : memref<8x16xbf16, #tpu.memory_space<vmem>>, vector<8x16xbf16>
    %c0_1 = arith.constant 0 : index
    %c0_2 = arith.constant 0 : index
    %1 = vector.load %arg2[%c0_1, %c0_2] : memref<16x32xbf16, #tpu.memory_space<vmem>>, vector<16x32xbf16>
    %cst = arith.constant dense<0.000000e+00> : vector<8x32xf32>
    %2 = tpu.matmul %0, %1, %cst {dimension_numbers = #tpu.dot_dimension_numbers<[1], [0], [0], [1], [0, 0, 1, 1], [], []>} : vector<8x16xbf16>, vector<16x32xbf16>, vector<8x32xf32> -> vector<8x32xf32>
    %c0_3 = arith.constant 0 : index
    %c0_4 = arith.constant 0 : index
    %3 = vector.load %arg3[%c0_3, %c0_4] : memref<1x32xf32, #tpu.memory_space<vmem>>, vector<1x32xf32>
    %4 = vector.broadcast %3 : vector<1x32xf32> to vector<8x32xf32>
    %5 = arith.addf %2, %4 : vector<8x32xf32>
    %cst_5 = arith.constant 0.000000e+00 : f32
    %6 = vector.broadcast %cst_5 : f32 to vector<8x32xf32>
    %7 = arith.maximumf %5, %6 : vector<8x32xf32>
    %8 = arith.truncf %7 : vector<8x32xf32> to vector<8x32xbf16>
    %c0_6 = arith.constant 0 : index
    %c0_7 = arith.constant 0 : index
    %9 = vector.load %arg4[%c0_6, %c0_7] : memref<32x32xbf16, #tpu.memory_space<vmem>>, vector<32x32xbf16>
    %cst_8 = arith.constant dense<0.000000e+00> : vector<8x32xf32>
    %10 = tpu.matmul %8, %9, %cst_8 {dimension_numbers = #tpu.dot_dimension_numbers<[1], [0], [0], [1], [0, 0, 1, 1], [], []>} : vector<8x32xbf16>, vector<32x32xbf16>, vector<8x32xf32> -> vector<8x32xf32>
    %c0_9 = arith.constant 0 : index
    %c0_10 = arith.constant 0 : index
    %11 = vector.load %arg5[%c0_9, %c0_10] : memref<1x32xf32, #tpu.memory_space<vmem>>, vector<1x32xf32>
    %12 = vector.broadcast %11 : vector<1x32xf32> to vector<8x32xf32>
    %13 = arith.addf %10, %12 : vector<8x32xf32>
    %cst_11 = arith.constant 0.000000e+00 : f32
    %14 = vector.broadcast %cst_11 : f32 to vector<8x32xf32>
    %15 = arith.maximumf %13, %14 : vector<8x32xf32>
    %16 = arith.truncf %15 : vector<8x32xf32> to vector<8x32xbf16>
    %c0_12 = arith.constant 0 : index
    %c0_13 = arith.constant 0 : index
    %17 = vector.load %arg6[%c0_12, %c0_13] : memref<32x128xbf16, #tpu.memory_space<vmem>>, vector<32x128xbf16>
    %cst_14 = arith.constant dense<0.000000e+00> : vector<8x128xf32>
    %18 = tpu.matmul %16, %17, %cst_14 {dimension_numbers = #tpu.dot_dimension_numbers<[1], [0], [0], [1], [0, 0, 1, 1], [], []>} : vector<8x32xbf16>, vector<32x128xbf16>, vector<8x128xf32> -> vector<8x128xf32>
    %c0_15 = arith.constant 0 : index
    %c0_16 = arith.constant 0 : index
    %19 = vector.load %arg7[%c0_15, %c0_16] : memref<1x128xf32, #tpu.memory_space<vmem>>, vector<1x128xf32>
    %20 = vector.broadcast %19 : vector<1x128xf32> to vector<8x128xf32>
    %21 = arith.addf %18, %20 : vector<8x128xf32>
    %22 = math.tanh %21 : vector<8x128xf32>
    %cst_17 = arith.constant 2.000000e+00 : f32
    %23 = vector.broadcast %cst_17 : f32 to vector<8x128xf32>
    %24 = arith.mulf %23, %22 : vector<8x128xf32>
    %c0_18 = arith.constant 0 : index
    %c0_19 = arith.constant 0 : index
    %25 = vector.load %arg8[%c0_18, %c0_19] : memref<8x128xf32, #tpu.memory_space<vmem>>, vector<8x128xf32>
    tpu.vector_store %arg8[%c0_18, %c0_19], %24 {strides = array<i32>} : memref<8x128xf32, #tpu.memory_space<vmem>>, vector<8x128xf32>,
    return
  }
  func.func @transform_0(%arg0: i32) -> (i32, i32) {
    %c0_i32 = arith.constant 0 : i32
    %c0_i32_0 = arith.constant 0 : i32
    return %arg0, %c0_i32 : i32, i32
  }
  func.func @transform_1(%arg0: i32) -> (i32, i32) {
    %c0_i32 = arith.constant 0 : i32
    %c0_i32_0 = arith.constant 0 : i32
    %c0_i32_1 = arith.constant 0 : i32
    return %c0_i32, %c0_i32_0 : i32, i32
  }
  func.func @transform_2(%arg0: i32) -> (i32, i32) {
    %c0_i32 = arith.constant 0 : i32
    %c0_i32_0 = arith.constant 0 : i32
    %c0_i32_1 = arith.constant 0 : i32
    return %c0_i32, %c0_i32_0 : i32, i32
  }
  func.func @transform_3(%arg0: i32) -> (i32, i32) {
    %c0_i32 = arith.constant 0 : i32
    %c0_i32_0 = arith.constant 0 : i32
    %c0_i32_1 = arith.constant 0 : i32
    return %c0_i32, %c0_i32_0 : i32, i32
  }
  func.func @transform_4(%arg0: i32) -> (i32, i32) {
    %c0_i32 = arith.constant 0 : i32
    %c0_i32_0 = arith.constant 0 : i32
    %c0_i32_1 = arith.constant 0 : i32
    return %c0_i32, %c0_i32_0 : i32, i32
  }
  func.func @transform_5(%arg0: i32) -> (i32, i32) {
    %c0_i32 = arith.constant 0 : i32
    %c0_i32_0 = arith.constant 0 : i32
    %c0_i32_1 = arith.constant 0 : i32
    return %c0_i32, %c0_i32_0 : i32, i32
  }
  func.func @transform_6(%arg0: i32) -> (i32, i32) {
    %c0_i32 = arith.constant 0 : i32
    %c0_i32_0 = arith.constant 0 : i32
    %c0_i32_1 = arith.constant 0 : i32
    return %c0_i32, %c0_i32_0 : i32, i32
  }
  func.func @transform_7(%arg0: i32) -> (i32, i32) {
    %c0_i32 = arith.constant 0 : i32
    %c0_i32_0 = arith.constant 0 : i32
    return %arg0, %c0_i32 : i32, i32
  }
}

module attributes {stable_mosaic.version = 11 : i64} {
  func.func @_actor_kernel(%arg0: i32, %arg1: memref<8x16xbf16, #tpu.memory_space<vmem>>, %arg2: memref<16x32xbf16, #tpu.memory_space<vmem>>, %arg3: memref<1x32xf32, #tpu.memory_space<vmem>>, %arg4: memref<32x32xbf16, #tpu.memory_space<vmem>>, %arg5: memref<1x32xf32, #tpu.memory_space<vmem>>, %arg6: memref<32x128xbf16, #tpu.memory_space<vmem>>, %arg7: memref<1x128xf32, #tpu.memory_space<vmem>>, %arg8: memref<8x128xf32, #tpu.memory_space<vmem>>) attributes {dimension_semantics = [#tpu.dimension_semantics<parallel>], iteration_bounds = array<i64: 1>, scalar_prefetch = 0 : i64, scratch_operands = 0 : i64, tpu.core_type = #tpu.core_type<tc>, window_params = [{transform_indices = @transform_0, window_bounds = array<i64: 8, 16>}, {pipeline_mode = #tpu.pipeline_mode<synchronous>, transform_indices = @transform_1, window_bounds = array<i64: 16, 32>}, {pipeline_mode = #tpu.pipeline_mode<synchronous>, transform_indices = @transform_2, window_bounds = array<i64: 1, 32>}, {pipeline_mode = #tpu.pipeline_mode<synchronous>, transform_indices = @transform_3, window_bounds = array<i64: 32, 32>}, {pipeline_mode = #tpu.pipeline_mode<synchronous>, transform_indices = @transform_4, window_bounds = array<i64: 1, 32>}, {pipeline_mode = #tpu.pipeline_mode<synchronous>, transform_indices = @transform_5, window_bounds = array<i64: 32, 128>}, {pipeline_mode = #tpu.pipeline_mode<synchronous>, transform_indices = @transform_6, window_bounds = array<i64: 1, 128>}, {transform_indices = @transform_7, window_bounds = array<i64: 8, 128>}]} {
    %c0 = arith.constant 0 : index
    %c0_0 = arith.constant 0 : index
    %0 = vector.load %arg1[%c0, %c0_0] : memref<8x16xbf16, #tpu.memory_space<vmem>>, vector<8x16xbf16>
    %c0_1 = arith.constant 0 : index
    %c0_2 = arith.constant 0 : index
    %1 = vector.load %arg2[%c0_1, %c0_2] : memref<16x32xbf16, #tpu.memory_space<vmem>>, vector<16x32xbf16>
    %cst = arith.constant dense<0.000000e+00> : vector<8x32xf32>
    %2 = tpu.matmul %0, %1, %cst {dimension_numbers = #tpu.dot_dimension_numbers<[1], [0], [0], [1], [0, 0, 1, 1], [], []>} : vector<8x16xbf16>, vector<16x32xbf16>, vector<8x32xf32> -> vector<8x32xf32>
    %c0_3 = arith.constant 0 : index
    %c0_4 = arith.constant 0 : index
    %3 = vector.load %arg3[%c0_3, %c0_4] : memref<1x32xf32, #tpu.memory_space<vmem>>, vector<1x32xf32>
    %4 = vector.broadcast %3 : vector<1x32xf32> to vector<8x32xf32>
    %5 = arith.addf %2, %4 : vector<8x32xf32>
    %cst_5 = arith.constant 0.000000e+00 : f32
    %6 = vector.broadcast %cst_5 : f32 to vector<8x32xf32>
    %7 = arith.maximumf %5, %6 : vector<8x32xf32>
    %8 = arith.truncf %7 : vector<8x32xf32> to vector<8x32xbf16>
    %c0_6 = arith.constant 0 : index
    %c0_7 = arith.constant 0 : index
    %9 = vector.load %arg4[%c0_6, %c0_7] : memref<32x32xbf16, #tpu.memory_space<vmem>>, vector<32x32xbf16>
    %cst_8 = arith.constant dense<0.000000e+00> : vector<8x32xf32>
    %10 = tpu.matmul %8, %9, %cst_8 {dimension_numbers = #tpu.dot_dimension_numbers<[1], [0], [0], [1], [0, 0, 1, 1], [], []>} : vector<8x32xbf16>, vector<32x32xbf16>, vector<8x32xf32> -> vector<8x32xf32>
    %c0_9 = arith.constant 0 : index
    %c0_10 = arith.constant 0 : index
    %11 = vector.load %arg5[%c0_9, %c0_10] : memref<1x32xf32, #tpu.memory_space<vmem>>, vector<1x32xf32>
    %12 = vector.broadcast %11 : vector<1x32xf32> to vector<8x32xf32>
    %13 = arith.addf %10, %12 : vector<8x32xf32>
    %cst_11 = arith.constant 0.000000e+00 : f32
    %14 = vector.broadcast %cst_11 : f32 to vector<8x32xf32>
    %15 = arith.maximumf %13, %14 : vector<8x32xf32>
    %16 = arith.truncf %15 : vector<8x32xf32> to vector<8x32xbf16>
    %c0_12 = arith.constant 0 : index
    %c0_13 = arith.constant 0 : index
    %17 = vector.load %arg6[%c0_12, %c0_13] : memref<32x128xbf16, #tpu.memory_space<vmem>>, vector<32x128xbf16>
    %cst_14 = arith.constant dense<0.000000e+00> : vector<8x128xf32>
    %18 = tpu.matmul %16, %17, %cst_14 {dimension_numbers = #tpu.dot_dimension_numbers<[1], [0], [0], [1], [0, 0, 1, 1], [], []>} : vector<8x32xbf16>, vector<32x128xbf16>, vector<8x128xf32> -> vector<8x128xf32>
    %c0_15 = arith.constant 0 : index
    %c0_16 = arith.constant 0 : index
    %19 = vector.load %arg7[%c0_15, %c0_16] : memref<1x128xf32, #tpu.memory_space<vmem>>, vector<1x128xf32>
    %20 = vector.broadcast %19 : vector<1x128xf32> to vector<8x128xf32>
    %21 = arith.addf %18, %20 : vector<8x128xf32>
    %22 = math.tanh %21 : vector<8x128xf32>
    %cst_17 = arith.constant 2.000000e+00 : f32
    %23 = vector.broadcast %cst_17 : f32 to vector<8x128xf32>
    %24 = arith.mulf %23, %22 : vector<8x128xf32>
    %c0_18 = arith.constant 0 : index
    %c0_19 = arith.constant 0 : index
    %25 = vector.load %arg8[%c0_18, %c0_19] : memref<8x128xf32, #tpu.memory_space<vmem>>, vector<8x128xf32>
    tpu.vector_store %arg8[%c0_18, %c0_19], %24 {strides = array<i32>} : memref<8x128xf32, #tpu.memory_space<vmem>>, vector<8x128xf32>,
    return
  }
  func.func @transform_0(%arg0: i32) -> (i32, i32) {
    %c0_i32 = arith.constant 0 : i32
    %c0_i32_0 = arith.constant 0 : i32
    return %arg0, %c0_i32 : i32, i32
  }
  func.func @transform_1(%arg0: i32) -> (i32, i32) {
    %c0_i32 = arith.constant 0 : i32
    %c0_i32_0 = arith.constant 0 : i32
    %c0_i32_1 = arith.constant 0 : i32
    return %c0_i32, %c0_i32_0 : i32, i32
  }
  func.func @transform_2(%arg0: i32) -> (i32, i32) {
    %c0_i32 = arith.constant 0 : i32
    %c0_i32_0 = arith.constant 0 : i32
    %c0_i32_1 = arith.constant 0 : i32
    return %c0_i32, %c0_i32_0 : i32, i32
  }
  func.func @transform_3(%arg0: i32) -> (i32, i32) {
    %c0_i32 = arith.constant 0 : i32
    %c0_i32_0 = arith.constant 0 : i32
    %c0_i32_1 = arith.constant 0 : i32
    return %c0_i32, %c0_i32_0 : i32, i32
  }
  func.func @transform_4(%arg0: i32) -> (i32, i32) {
    %c0_i32 = arith.constant 0 : i32
    %c0_i32_0 = arith.constant 0 : i32
    %c0_i32_1 = arith.constant 0 : i32
    return %c0_i32, %c0_i32_0 : i32, i32
  }
  func.func @transform_5(%arg0: i32) -> (i32, i32) {
    %c0_i32 = arith.constant 0 : i32
    %c0_i32_0 = arith.constant 0 : i32
    %c0_i32_1 = arith.constant 0 : i32
    return %c0_i32, %c0_i32_0 : i32, i32
  }
  func.func @transform_6(%arg0: i32) -> (i32, i32) {
    %c0_i32 = arith.constant 0 : i32
    %c0_i32_0 = arith.constant 0 : i32
    %c0_i32_1 = arith.constant 0 : i32
    return %c0_i32, %c0_i32_0 : i32, i32
  }
  func.func @transform_7(%arg0: i32) -> (i32, i32) {
    %c0_i32 = arith.constant 0 : i32
    %c0_i32_0 = arith.constant 0 : i32
    return %arg0, %c0_i32 : i32, i32
  }
}

</mosaic_0001>

<llo_original>
// kernel: tpu_custom_call.1
$region0: #{tpu_custom_call.1}
  #allocation0 [shape = 'u32[]', space=smem, size = 0x4, offset = 0x4, fixed_abs, tag = 'smem constant byte address 0x4 - core index']
  #allocation1 [shape = 'u32[144,128]{1,0:T(1,128)}', space=vmem, size = 0x12000, scoped, tag = 'internal scratch']
  %s0 = inlined_call_operand.hbm [shape: bf16[8,16], index: 0, kind: input, shape index: {}]
  %s1 = inlined_call_operand.hbm [shape: bf16[16,32], index: 1, kind: input, shape index: {}]
  %s2 = inlined_call_operand.vmem [shape: f32[1,32], index: 2, kind: input, shape index: {}]
  %s3 = inlined_call_operand.hbm [shape: bf16[32,32], index: 3, kind: input, shape index: {}]
  %s4 = inlined_call_operand.vmem [shape: f32[1,32], index: 4, kind: input, shape index: {}]
  %s5 = inlined_call_operand.vmem [shape: bf16[32,128], index: 5, kind: input, shape index: {}]
  %s6 = inlined_call_operand.vmem [shape: f32[1,128], index: 6, kind: input, shape index: {}]
  %s7 = inlined_call_operand.hbm [shape: f32[8,128], index: 7, kind: output, shape index: {}]
  %s8 = sld [smem:[#allocation0]]
  $region50: #{tpu_custom_call.1} parent=0
    _
  %s10 = ssub.s32 1, %s8
  %s11 = scalar_select 0, %s10, %s8
  $region1: #{tpu_custom_call.1} parent=0
    #allocation2 [shape = 'u8[2048]{0}', space=vmem, size = 0x800, scoped, tag = 'input window, operand 0, single buffered']
    #allocation3 [shape = 's32[1]{0}', space=sflag, size = 0x4, scoped, tag = 'scoped memory for tpu_custom_call.1']
    #allocation4 [shape = 's32[1]{0}', space=sflag, size = 0x4, scoped, tag = 'scoped memory for tpu_custom_call.1']
    #allocation5 [shape = 'u8[4096]{0}', space=vmem, size = 0x1000, scoped, tag = 'input window, operand 1, single buffered']
    #allocation6 [shape = 's32[1]{0}', space=sflag, size = 0x4, scoped, tag = 'scoped memory for tpu_custom_call.1']
    #allocation7 [shape = 'u8[8192]{0}', space=vmem, size = 0x2000, scoped, tag = 'input window, operand 3, single buffered']
    #allocation8 [shape = 'u8[4096]{0}', space=vmem, size = 0x1000, scoped, tag = 'output window, operand 0, single buffered']
    %12 = vsyncpa [#allocation3], 0
    %13 = vsyncpa [#allocation6], 0
    %14 = vsyncpa [#allocation4], 0
    // Predicated region
    $region2: #{tpu_custom_call.1} parent=1 // pred_check
      _
    $region3: #{tpu_custom_call.1} parent=1 // pred_check_branch
      %16 = sbr.rel (0) target = $region5
    $region4: #{tpu_custom_call.1} parent=1 // pred_region
      %s18 = ssub.s32 64, 64
      %19 = vsyncadd [#allocation3], %s18
      %s21 = sshll.u32 [#allocation2], 4
      %s22 = int_to_ptr.vmem [resolvable:$true] %s21
      %24 = dma.hbm_to_vmem [thread:$0]  %s0, 64, %s22, [#allocation3]
    $region5: #{tpu_custom_call.1} parent=1 // pred_fallthru
      _
    // Predicated region
    $region6: #{tpu_custom_call.1} parent=1 // pred_check
      _
    $region7: #{tpu_custom_call.1} parent=1 // pred_check_branch
      %26 = sbr.rel (0) target = $region9
    $region8: #{tpu_custom_call.1} parent=1 // pred_region
      %s28 = ssub.s32 128, 128
      %29 = vsyncadd [#allocation6], %s28
      %s30 = sshll.u32 [#allocation5], 4
      %s31 = int_to_ptr.vmem [resolvable:$true] %s30
      %36 = dma.hbm_to_vmem [thread:$0]  %s1, 128, %s31, [#allocation6], 64, 64, 4
    $region9: #{tpu_custom_call.1} parent=1 // pred_fallthru
      _
    // Predicated region
    $region10: #{tpu_custom_call.1} parent=1 // pred_check
      _
    $region11: #{tpu_custom_call.1} parent=1 // pred_check_branch
      %38 = sbr.rel (0) target = $region13
    $region12: #{tpu_custom_call.1} parent=1 // pred_region
      _
    $region13: #{tpu_custom_call.1} parent=1 // pred_fallthru
      _
    // Predicated region
    $region14: #{tpu_custom_call.1} parent=1 // pred_check
      _
    $region15: #{tpu_custom_call.1} parent=1 // pred_check_branch
      %40 = sbr.rel (0) target = $region17
    $region16: #{tpu_custom_call.1} parent=1 // pred_region
      %s42 = ssub.s32 256, 256
      %43 = vsyncadd [#allocation6], %s42
      %s44 = sshll.u32 [#allocation7], 4
      %s45 = int_to_ptr.vmem [resolvable:$true] %s44
      %50 = dma.hbm_to_vmem [thread:$0]  %s3, 256, %s45, [#allocation6], 64, 64, 4
    $region17: #{tpu_custom_call.1} parent=1 // pred_fallthru
      _
    // Predicated region
    $region18: #{tpu_custom_call.1} parent=1 // pred_check
      _
    $region19: #{tpu_custom_call.1} parent=1 // pred_check_branch
      %52 = sbr.rel (0) target = $region21
    $region20: #{tpu_custom_call.1} parent=1 // pred_region
      _
    $region21: #{tpu_custom_call.1} parent=1 // pred_fallthru
      _
    // Predicated region
    $region22: #{tpu_custom_call.1} parent=1 // pred_check
      _
    $region23: #{tpu_custom_call.1} parent=1 // pred_check_branch
      %54 = sbr.rel (0) target = $region25
    $region24: #{tpu_custom_call.1} parent=1 // pred_region
      _
    $region25: #{tpu_custom_call.1} parent=1 // pred_fallthru
      _
    // Predicated region
    $region26: #{tpu_custom_call.1} parent=1 // pred_check
      _
    $region27: #{tpu_custom_call.1} parent=1 // pred_check_branch
      %56 = sbr.rel (0) target = $region29
    $region28: #{tpu_custom_call.1} parent=1 // pred_region
      _
    $region29: #{tpu_custom_call.1} parent=1 // pred_fallthru
      _
    // Predicated region
    $region30: #{tpu_custom_call.1} parent=1 // pred_check
      _
    $region31: #{tpu_custom_call.1} parent=1 // pred_check_branch
      %58 = sbr.rel (0) target = $region33
    $region32: #{tpu_custom_call.1} parent=1 // pred_region
      %59 = dma.done [#allocation3], 64
    $region33: #{tpu_custom_call.1} parent=1 // pred_fallthru
      _
    // Predicated region
    $region34: #{tpu_custom_call.1} parent=1 // pred_check
      _
    $region35: #{tpu_custom_call.1} parent=1 // pred_check_branch
      %61 = sbr.rel (0) target = $region37
    $region36: #{tpu_custom_call.1} parent=1 // pred_region
      %62 = dma.done [#allocation6], 128
    $region37: #{tpu_custom_call.1} parent=1 // pred_fallthru
      _
    // Predicated region
    $region38: #{tpu_custom_call.1} parent=1 // pred_check
      _
    $region39: #{tpu_custom_call.1} parent=1 // pred_check_branch
      %64 = sbr.rel (0) target = $region41
    $region40: #{tpu_custom_call.1} parent=1 // pred_region
      %65 = dma.done [#allocation6], 256
    $region41: #{tpu_custom_call.1} parent=1 // pred_fallthru
      _
    %v67 = vld [vmem:[#allocation2] sm:$0xf]
    %v68 = vld [vmem:[#allocation5] sm:$0xf]
    %v69 = vld [vmem:[#allocation5 + $0x4] sm:$0xf]
    %v70 = vld [vmem:[%s2] sm:$0x1]
    %v72 = vlaneseq
    %v73 = vshrl.u32 %v72, 7
    %v74 = vsub.s32 0, %v73
    %v75 = vrot.slane %v70, %v74
    %v79 = vunpack.c.l.b16 %v68
    %v80 = vunpack.c.l.b16 %v69
    %v81 = vpack.c.b16 %v80, %v79
    %vm83 = vcmask 130048
    %v85 = vsel %vm83, %v67, 0
    %87 = vmatprep.subr.bf16.mxu0 0
    %88 = vmatpush1.bf16.msra.mxu0 %v81
    %89 = vmatprep.subr.bf16.mxu0 0
    %90 = vmatpush1.bf16.msra.mxu0 0
    %91 = vmatprep.subr.bf16.mxu0 0
    %92 = vmatpush1.bf16.msra.mxu0 0
    %93 = vmatprep.subr.bf16.mxu0 0
    %94 = vmatpush1.bf16.msra.mxu0 0
    %95 = vmatprep.subr.bf16.mxu0 0
    %96 = vmatpush1.bf16.msra.mxu0 0
    %97 = vmatprep.subr.bf16.mxu0 0
    %98 = vmatpush1.bf16.msra.mxu0 0
    %99 = vmatprep.subr.bf16.mxu0 0
    %100 = vmatpush1.bf16.msra.mxu0 0
    %101 = vmatprep.subr.bf16.mxu0 0
    %102 = vmatpush1.bf16.msra.mxu0 0
    %103 = vmatprep.subr.bf16.mxu0 0
    %104 = vmatpush1.bf16.msra.mxu0 0
    %105 = vmatprep.subr.bf16.mxu0 0
    %106 = vmatpush1.bf16.msra.mxu0 0
    %107 = vmatprep.subr.bf16.mxu0 0
    %108 = vmatpush1.bf16.msra.mxu0 0
    %109 = vmatprep.subr.bf16.mxu0 0
    %110 = vmatpush1.bf16.msra.mxu0 0
    %111 = vmatprep.subr.bf16.mxu0 0
    %112 = vmatpush1.bf16.msra.mxu0 0
    %113 = vmatprep.subr.bf16.mxu0 0
    %114 = vmatpush1.bf16.msra.mxu0 0
    %115 = vmatprep.subr.bf16.mxu0 0
    %116 = vmatpush1.bf16.msra.mxu0 0
    %117 = vmatprep.subr.bf16.mxu0 0
    %118 = vmatpush1.bf16.msra.mxu0 0
    %119 = vmatprep.mubr.bf16.mxu0 0
    %120 = vmatmul.mubr.bf16.gmra.mrb[0].mxu0 %v85
    %v121 = vpop.f32.mrb[0].mxu0
    %v122 = vadd.f32 %v75, %v121
    %v123 = vpop.f32.mrb[0].mxu0
    %v124 = vpop.f32.mrb[0].mxu0
    %v125 = vpop.f32.mrb[0].mxu0
    %126 = vdwg.mxu0
    %v127 = vmax.f32 %v122, 0.0
    %v128 = vpack.c.bf16 %v127, %v127
    %v129 = vld [vmem:[#allocation7] sm:$0xf]
    %v130 = vld [vmem:[#allocation7 + $0x4] sm:$0xf]
    %v131 = vld [vmem:[#allocation7 + $0x8] sm:$0xf]
    %v132 = vld [vmem:[#allocation7 + $0xc] sm:$0xf]
    %v133 = vld [vmem:[%s4] sm:$0x1]
    %v135 = vlaneseq
    %v136 = vshrl.u32 %v135, 7
    %v137 = vsub.s32 0, %v136
    %v138 = vrot.slane %v133, %v137
    %v144 = vunpack.c.l.b16 %v129
    %v145 = vunpack.c.l.b16 %v130
    %v146 = vunpack.c.l.b16 %v131
    %v147 = vunpack.c.l.b16 %v132
    %v148 = vpack.c.b16 %v145, %v144
    %v149 = vpack.c.b16 %v147, %v146
    %vm152 = vcmask 261120
    %v154 = vsel %vm152, %v128, 0
    %156 = vmatprep.subr.bf16.mxu0 0
    %157 = vmatpush1.bf16.msra.mxu0 %v148
    %158 = vmatprep.subr.bf16.mxu0 0
    %159 = vmatpush1.bf16.msra.mxu0 %v149
    %160 = vmatprep.subr.bf16.mxu0 0
    %161 = vmatpush1.bf16.msra.mxu0 0
    %162 = vmatprep.subr.bf16.mxu0 0
    %163 = vmatpush1.bf16.msra.mxu0 0
    %164 = vmatprep.subr.bf16.mxu0 0
    %165 = vmatpush1.bf16.msra.mxu0 0
    %166 = vmatprep.subr.bf16.mxu0 0
    %167 = vmatpush1.bf16.msra.mxu0 0
    %168 = vmatprep.subr.bf16.mxu0 0
    %169 = vmatpush1.bf16.msra.mxu0 0
    %170 = vmatprep.subr.bf16.mxu0 0
    %171 = vmatpush1.bf16.msra.mxu0 0
    %172 = vmatprep.subr.bf16.mxu0 0
    %173 = vmatpush1.bf16.msra.mxu0 0
    %174 = vmatprep.subr.bf16.mxu0 0
    %175 = vmatpush1.bf16.msra.mxu0 0
    %176 = vmatprep.subr.bf16.mxu0 0
    %177 = vmatpush1.bf16.msra.mxu0 0
    %178 = vmatprep.subr.bf16.mxu0 0
    %179 = vmatpush1.bf16.msra.mxu0 0
    %180 = vmatprep.subr.bf16.mxu0 0
    %181 = vmatpush1.bf16.msra.mxu0 0
    %182 = vmatprep.subr.bf16.mxu0 0
    %183 = vmatpush1.bf16.msra.mxu0 0
    %184 = vmatprep.subr.bf16.mxu0 0
    %185 = vmatpush1.bf16.msra.mxu0 0
    %186 = vmatprep.subr.bf16.mxu0 0
    %187 = vmatpush1.bf16.msra.mxu0 0
    %188 = vmatprep.mubr.bf16.mxu0 0
    %189 = vmatmul.mubr.bf16.gmra.mrb[0].mxu0 %v154
    %v190 = vpop.f32.mrb[0].mxu0
    %v191 = vadd.f32 %v138, %v190
    %v192 = vpop.f32.mrb[0].mxu0
    %v193 = vpop.f32.mrb[0].mxu0
    %v194 = vpop.f32.mrb[0].mxu0
    %195 = vdwg.mxu0
    %v196 = vmax.f32 %v191, 0.0
    %v197 = vpack.c.bf16 %v196, %v196
    %v198 = vld [vmem:[%s5] sm:$0xf]
    %v199 = vld [vmem:[%s5 + $0x4] sm:$0xf]
    %v200 = vld [vmem:[%s5 + $0x8] sm:$0xf]
    %v201 = vld [vmem:[%s5 + $0xc] sm:$0xf]
    %v202 = vld [vmem:[%s6] sm:$0x1]
    %v204 = vlaneseq
    %v205 = vshrl.u32 %v204, 7
    %v206 = vsub.s32 0, %v205
    %v207 = vrot.slane %v202, %v206
    %v213 = vunpack.c.l.b16 %v198
    %v214 = vunpack.c.l.b16 %v199
    %v215 = vunpack.c.l.b16 %v200
    %v216 = vunpack.c.l.b16 %v201
    %v217 = vpack.c.b16 %v214, %v213
    %v218 = vpack.c.b16 %v216, %v215
    %v222 = vsel %vm152, %v197, 0
    %224 = vmatprep.subr.bf16.mxu0 0
    %225 = vmatpush1.bf16.msra.mxu0 %v217
    %226 = vmatprep.subr.bf16.mxu0 0
    %227 = vmatpush1.bf16.msra.mxu0 %v218
    %228 = vmatprep.subr.bf16.mxu0 0
    %229 = vmatpush1.bf16.msra.mxu0 0
    %230 = vmatprep.subr.bf16.mxu0 0
    %231 = vmatpush1.bf16.msra.mxu0 0
    %232 = vmatprep.subr.bf16.mxu0 0
    %233 = vmatpush1.bf16.msra.mxu0 0
    %234 = vmatprep.subr.bf16.mxu0 0
    %235 = vmatpush1.bf16.msra.mxu0 0
    %236 = vmatprep.subr.bf16.mxu0 0
    %237 = vmatpush1.bf16.msra.mxu0 0
    %238 = vmatprep.subr.bf16.mxu0 0
    %239 = vmatpush1.bf16.msra.mxu0 0
    %240 = vmatprep.subr.bf16.mxu0 0
    %241 = vmatpush1.bf16.msra.mxu0 0
    %242 = vmatprep.subr.bf16.mxu0 0
    %243 = vmatpush1.bf16.msra.mxu0 0
    %244 = vmatprep.subr.bf16.mxu0 0
    %245 = vmatpush1.bf16.msra.mxu0 0
    %246 = vmatprep.subr.bf16.mxu0 0
    %247 = vmatpush1.bf16.msra.mxu0 0
    %248 = vmatprep.subr.bf16.mxu0 0
    %249 = vmatpush1.bf16.msra.mxu0 0
    %250 = vmatprep.subr.bf16.mxu0 0
    %251 = vmatpush1.bf16.msra.mxu0 0
    %252 = vmatprep.subr.bf16.mxu0 0
    %253 = vmatpush1.bf16.msra.mxu0 0
    %254 = vmatprep.subr.bf16.mxu0 0
    %255 = vmatpush1.bf16.msra.mxu0 0
    %256 = vmatprep.mubr.bf16.mxu0 0
    %257 = vmatmul.mubr.bf16.gmra.mrb[0].mxu0 %v222
    %v258 = vpop.f32.mrb[0].mxu0
    %v259 = vadd.f32 %v207, %v258
    %v260 = vpop.f32.mrb[0].mxu0
    %v261 = vpop.f32.mrb[0].mxu0
    %v262 = vpop.f32.mrb[0].mxu0
    %263 = vdwg.mxu0
    %v264 = vtanh.pop %v259
    %v265 = vmul.f32 %v264, 2.0
    %266 = vst [vmem:[#allocation8] sm:$0xff] %v265
    // Predicated region
    $region42: #{tpu_custom_call.1} parent=1 // pred_check
      _
    $region43: #{tpu_custom_call.1} parent=1 // pred_check_branch
      %268 = sbr.rel (0) target = $region45
    $region44: #{tpu_custom_call.1} parent=1 // pred_region
      %s270 = ssub.s32 128, 128
      %271 = vsyncadd [#allocation4], %s270
      %s273 = sshll.u32 [#allocation8], 4
      %s274 = int_to_ptr.vmem [resolvable:$true] %s273
      %276 = dma.vmem_to_hbm [thread:$0]  %s274, 128, %s7, [#allocation4]
    $region45: #{tpu_custom_call.1} parent=1 // pred_fallthru
      _
    // Predicated region
    $region46: #{tpu_custom_call.1} parent=1 // pred_check
      _
    $region47: #{tpu_custom_call.1} parent=1 // pred_check_branch
      %278 = sbr.rel (0) target = $region49
    $region48: #{tpu_custom_call.1} parent=1 // pred_region
      %279 = dma.done [#allocation4], 128
    $region49: #{tpu_custom_call.1} parent=1 // pred_fallthru
      _
    %280 = vsyncpa [#allocation3], 1
    %281 = vsyncpa [#allocation6], 1
    %282 = vsyncpa [#allocation4], 1

// kernel: tpu_custom_call.1
$region0: #{tpu_custom_call.1}
  #allocation0 [shape = 'u32[]', space=smem, size = 0x4, offset = 0x4, fixed_abs, tag = 'smem constant byte address 0x4 - core index']
  #allocation1 [shape = 'u32[144,128]{1,0:T(1,128)}', space=vmem, size = 0x12000, scoped, tag = 'internal scratch']
  %s0 = inlined_call_operand.hbm [shape: bf16[8,16], index: 0, kind: input, shape index: {}]
  %s1 = inlined_call_operand.hbm [shape: bf16[16,32], index: 1, kind: input, shape index: {}]
  %s2 = inlined_call_operand.vmem [shape: f32[1,32], index: 2, kind: input, shape index: {}]
  %s3 = inlined_call_operand.hbm [shape: bf16[32,32], index: 3, kind: input, shape index: {}]
  %s4 = inlined_call_operand.vmem [shape: f32[1,32], index: 4, kind: input, shape index: {}]
  %s5 = inlined_call_operand.vmem [shape: bf16[32,128], index: 5, kind: input, shape index: {}]
  %s6 = inlined_call_operand.vmem [shape: f32[1,128], index: 6, kind: input, shape index: {}]
  %s7 = inlined_call_operand.hbm [shape: f32[8,128], index: 7, kind: output, shape index: {}]
  %s8 = sld [smem:[#allocation0]]
  $region50: #{tpu_custom_call.1} parent=0
    _
  %s10 = ssub.s32 1, %s8
  %s11 = scalar_select 0, %s10, %s8
  $region1: #{tpu_custom_call.1} parent=0
    #allocation2 [shape = 'u8[2048]{0}', space=vmem, size = 0x800, scoped, tag = 'input window, operand 0, single buffered']
    #allocation3 [shape = 's32[1]{0}', space=sflag, size = 0x4, scoped, tag = 'scoped memory for tpu_custom_call.1']
    #allocation4 [shape = 's32[1]{0}', space=sflag, size = 0x4, scoped, tag = 'scoped memory for tpu_custom_call.1']
    #allocation5 [shape = 'u8[4096]{0}', space=vmem, size = 0x1000, scoped, tag = 'input window, operand 1, single buffered']
    #allocation6 [shape = 's32[1]{0}', space=sflag, size = 0x4, scoped, tag = 'scoped memory for tpu_custom_call.1']
    #allocation7 [shape = 'u8[8192]{0}', space=vmem, size = 0x2000, scoped, tag = 'input window, operand 3, single buffered']
    #allocation8 [shape = 'u8[4096]{0}', space=vmem, size = 0x1000, scoped, tag = 'output window, operand 0, single buffered']
    %12 = vsyncpa [#allocation3], 0
    %13 = vsyncpa [#allocation6], 0
    %14 = vsyncpa [#allocation4], 0
    // Predicated region
    $region2: #{tpu_custom_call.1} parent=1 // pred_check
      _
    $region3: #{tpu_custom_call.1} parent=1 // pred_check_branch
      %16 = sbr.rel (0) target = $region5
    $region4: #{tpu_custom_call.1} parent=1 // pred_region
      %s18 = ssub.s32 64, 64
      %19 = vsyncadd [#allocation3], %s18
      %s21 = sshll.u32 [#allocation2], 4
      %s22 = int_to_ptr.vmem [resolvable:$true] %s21
      %24 = dma.hbm_to_vmem [thread:$0]  %s0, 64, %s22, [#allocation3]
    $region5: #{tpu_custom_call.1} parent=1 // pred_fallthru
      _
    // Predicated region
    $region6: #{tpu_custom_call.1} parent=1 // pred_check
      _
    $region7: #{tpu_custom_call.1} parent=1 // pred_check_branch
      %26 = sbr.rel (0) target = $region9
    $region8: #{tpu_custom_call.1} parent=1 // pred_region
      %s28 = ssub.s32 128, 128
      %29 = vsyncadd [#allocation6], %s28
      %s30 = sshll.u32 [#allocation5], 4
      %s31 = int_to_ptr.vmem [resolvable:$true] %s30
      %36 = dma.hbm_to_vmem [thread:$0]  %s1, 128, %s31, [#allocation6], 64, 64, 4
    $region9: #{tpu_custom_call.1} parent=1 // pred_fallthru
      _
    // Predicated region
    $region10: #{tpu_custom_call.1} parent=1 // pred_check
      _
    $region11: #{tpu_custom_call.1} parent=1 // pred_check_branch
      %38 = sbr.rel (0) target = $region13
    $region12: #{tpu_custom_call.1} parent=1 // pred_region
      _
    $region13: #{tpu_custom_call.1} parent=1 // pred_fallthru
      _
    // Predicated region
    $region14: #{tpu_custom_call.1} parent=1 // pred_check
      _
    $region15: #{tpu_custom_call.1} parent=1 // pred_check_branch
      %40 = sbr.rel (0) target = $region17
    $region16: #{tpu_custom_call.1} parent=1 // pred_region
      %s42 = ssub.s32 256, 256
      %43 = vsyncadd [#allocation6], %s42
      %s44 = sshll.u32 [#allocation7], 4
      %s45 = int_to_ptr.vmem [resolvable:$true] %s44
      %50 = dma.hbm_to_vmem [thread:$0]  %s3, 256, %s45, [#allocation6], 64, 64, 4
    $region17: #{tpu_custom_call.1} parent=1 // pred_fallthru
      _
    // Predicated region
    $region18: #{tpu_custom_call.1} parent=1 // pred_check
      _
    $region19: #{tpu_custom_call.1} parent=1 // pred_check_branch
      %52 = sbr.rel (0) target = $region21
    $region20: #{tpu_custom_call.1} parent=1 // pred_region
      _
    $region21: #{tpu_custom_call.1} parent=1 // pred_fallthru
      _
    // Predicated region
    $region22: #{tpu_custom_call.1} parent=1 // pred_check
      _
    $region23: #{tpu_custom_call.1} parent=1 // pred_check_branch
      %54 = sbr.rel (0) target = $region25
    $region24: #{tpu_custom_call.1} parent=1 // pred_region
      _
    $region25: #{tpu_custom_call.1} parent=1 // pred_fallthru
      _
    // Predicated region
    $region26: #{tpu_custom_call.1} parent=1 // pred_check
      _
    $region27: #{tpu_custom_call.1} parent=1 // pred_check_branch
      %56 = sbr.rel (0) target = $region29
    $region28: #{tpu_custom_call.1} parent=1 // pred_region
      _
    $region29: #{tpu_custom_call.1} parent=1 // pred_fallthru
      _
    // Predicated region
    $region30: #{tpu_custom_call.1} parent=1 // pred_check
      _
    $region31: #{tpu_custom_call.1} parent=1 // pred_check_branch
      %58 = sbr.rel (0) target = $region33
    $region32: #{tpu_custom_call.1} parent=1 // pred_region
      %59 = dma.done [#allocation3], 64
    $region33: #{tpu_custom_call.1} parent=1 // pred_fallthru
      _
    // Predicated region
    $region34: #{tpu_custom_call.1} parent=1 // pred_check
      _
    $region35: #{tpu_custom_call.1} parent=1 // pred_check_branch
      %61 = sbr.rel (0) target = $region37
    $region36: #{tpu_custom_call.1} parent=1 // pred_region
      %62 = dma.done [#allocation6], 128
    $region37: #{tpu_custom_call.1} parent=1 // pred_fallthru
      _
    // Predicated region
    $region38: #{tpu_custom_call.1} parent=1 // pred_check
      _
    $region39: #{tpu_custom_call.1} parent=1 // pred_check_branch
      %64 = sbr.rel (0) target = $region41
    $region40: #{tpu_custom_call.1} parent=1 // pred_region
      %65 = dma.done [#allocation6], 256
    $region41: #{tpu_custom_call.1} parent=1 // pred_fallthru
      _
    %v67 = vld [vmem:[#allocation2] sm:$0xf]
    %v68 = vld [vmem:[#allocation5] sm:$0xf]
    %v69 = vld [vmem:[#allocation5 + $0x4] sm:$0xf]
    %v70 = vld [vmem:[%s2] sm:$0x1]
    %v72 = vlaneseq
    %v73 = vshrl.u32 %v72, 7
    %v74 = vsub.s32 0, %v73
    %v75 = vrot.slane %v70, %v74
    %v79 = vunpack.c.l.b16 %v68
    %v80 = vunpack.c.l.b16 %v69
    %v81 = vpack.c.b16 %v80, %v79
    %vm83 = vcmask 130048
    %v85 = vsel %vm83, %v67, 0
    %87 = vmatprep.subr.bf16.mxu0 0
    %88 = vmatpush1.bf16.msra.mxu0 %v81
    %89 = vmatprep.subr.bf16.mxu0 0
    %90 = vmatpush1.bf16.msra.mxu0 0
    %91 = vmatprep.subr.bf16.mxu0 0
    %92 = vmatpush1.bf16.msra.mxu0 0
    %93 = vmatprep.subr.bf16.mxu0 0
    %94 = vmatpush1.bf16.msra.mxu0 0
    %95 = vmatprep.subr.bf16.mxu0 0
    %96 = vmatpush1.bf16.msra.mxu0 0
    %97 = vmatprep.subr.bf16.mxu0 0
    %98 = vmatpush1.bf16.msra.mxu0 0
    %99 = vmatprep.subr.bf16.mxu0 0
    %100 = vmatpush1.bf16.msra.mxu0 0
    %101 = vmatprep.subr.bf16.mxu0 0
    %102 = vmatpush1.bf16.msra.mxu0 0
    %103 = vmatprep.subr.bf16.mxu0 0
    %104 = vmatpush1.bf16.msra.mxu0 0
    %105 = vmatprep.subr.bf16.mxu0 0
    %106 = vmatpush1.bf16.msra.mxu0 0
    %107 = vmatprep.subr.bf16.mxu0 0
    %108 = vmatpush1.bf16.msra.mxu0 0
    %109 = vmatprep.subr.bf16.mxu0 0
    %110 = vmatpush1.bf16.msra.mxu0 0
    %111 = vmatprep.subr.bf16.mxu0 0
    %112 = vmatpush1.bf16.msra.mxu0 0
    %113 = vmatprep.subr.bf16.mxu0 0
    %114 = vmatpush1.bf16.msra.mxu0 0
    %115 = vmatprep.subr.bf16.mxu0 0
    %116 = vmatpush1.bf16.msra.mxu0 0
    %117 = vmatprep.subr.bf16.mxu0 0
    %118 = vmatpush1.bf16.msra.mxu0 0
    %119 = vmatprep.mubr.bf16.mxu0 0
    %120 = vmatmul.mubr.bf16.gmra.mrb[0].mxu0 %v85
    %v121 = vpop.f32.mrb[0].mxu0
    %v122 = vadd.f32 %v75, %v121
    %v123 = vpop.f32.mrb[0].mxu0
    %v124 = vpop.f32.mrb[0].mxu0
    %v125 = vpop.f32.mrb[0].mxu0
    %126 = vdwg.mxu0
    %v127 = vmax.f32 %v122, 0.0
    %v128 = vpack.c.bf16 %v127, %v127
    %v129 = vld [vmem:[#allocation7] sm:$0xf]
    %v130 = vld [vmem:[#allocation7 + $0x4] sm:$0xf]
    %v131 = vld [vmem:[#allocation7 + $0x8] sm:$0xf]
    %v132 = vld [vmem:[#allocation7 + $0xc] sm:$0xf]
    %v133 = vld [vmem:[%s4] sm:$0x1]
    %v135 = vlaneseq
    %v136 = vshrl.u32 %v135, 7
    %v137 = vsub.s32 0, %v136
    %v138 = vrot.slane %v133, %v137
    %v144 = vunpack.c.l.b16 %v129
    %v145 = vunpack.c.l.b16 %v130
    %v146 = vunpack.c.l.b16 %v131
    %v147 = vunpack.c.l.b16 %v132
    %v148 = vpack.c.b16 %v145, %v144
    %v149 = vpack.c.b16 %v147, %v146
    %vm152 = vcmask 261120
    %v154 = vsel %vm152, %v128, 0
    %156 = vmatprep.subr.bf16.mxu0 0
    %157 = vmatpush1.bf16.msra.mxu0 %v148
    %158 = vmatprep.subr.bf16.mxu0 0
    %159 = vmatpush1.bf16.msra.mxu0 %v149
    %160 = vmatprep.subr.bf16.mxu0 0
    %161 = vmatpush1.bf16.msra.mxu0 0
    %162 = vmatprep.subr.bf16.mxu0 0
    %163 = vmatpush1.bf16.msra.mxu0 0
    %164 = vmatprep.subr.bf16.mxu0 0
    %165 = vmatpush1.bf16.msra.mxu0 0
    %166 = vmatprep.subr.bf16.mxu0 0
    %167 = vmatpush1.bf16.msra.mxu0 0
    %168 = vmatprep.subr.bf16.mxu0 0
    %169 = vmatpush1.bf16.msra.mxu0 0
    %170 = vmatprep.subr.bf16.mxu0 0
    %171 = vmatpush1.bf16.msra.mxu0 0
    %172 = vmatprep.subr.bf16.mxu0 0
    %173 = vmatpush1.bf16.msra.mxu0 0
    %174 = vmatprep.subr.bf16.mxu0 0
    %175 = vmatpush1.bf16.msra.mxu0 0
    %176 = vmatprep.subr.bf16.mxu0 0
    %177 = vmatpush1.bf16.msra.mxu0 0
    %178 = vmatprep.subr.bf16.mxu0 0
    %179 = vmatpush1.bf16.msra.mxu0 0
    %180 = vmatprep.subr.bf16.mxu0 0
    %181 = vmatpush1.bf16.msra.mxu0 0
    %182 = vmatprep.subr.bf16.mxu0 0
    %183 = vmatpush1.bf16.msra.mxu0 0
    %184 = vmatprep.subr.bf16.mxu0 0
    %185 = vmatpush1.bf16.msra.mxu0 0
    %186 = vmatprep.subr.bf16.mxu0 0
    %187 = vmatpush1.bf16.msra.mxu0 0
    %188 = vmatprep.mubr.bf16.mxu0 0
    %189 = vmatmul.mubr.bf16.gmra.mrb[0].mxu0 %v154
    %v190 = vpop.f32.mrb[0].mxu0
    %v191 = vadd.f32 %v138, %v190
    %v192 = vpop.f32.mrb[0].mxu0
    %v193 = vpop.f32.mrb[0].mxu0
    %v194 = vpop.f32.mrb[0].mxu0
    %195 = vdwg.mxu0
    %v196 = vmax.f32 %v191, 0.0
    %v197 = vpack.c.bf16 %v196, %v196
    %v198 = vld [vmem:[%s5] sm:$0xf]
    %v199 = vld [vmem:[%s5 + $0x4] sm:$0xf]
    %v200 = vld [vmem:[%s5 + $0x8] sm:$0xf]
    %v201 = vld [vmem:[%s5 + $0xc] sm:$0xf]
    %v202 = vld [vmem:[%s6] sm:$0x1]
    %v204 = vlaneseq
    %v205 = vshrl.u32 %v204, 7
    %v206 = vsub.s32 0, %v205
    %v207 = vrot.slane %v202, %v206
    %v213 = vunpack.c.l.b16 %v198
    %v214 = vunpack.c.l.b16 %v199
    %v215 = vunpack.c.l.b16 %v200
    %v216 = vunpack.c.l.b16 %v201
    %v217 = vpack.c.b16 %v214, %v213
    %v218 = vpack.c.b16 %v216, %v215
    %v222 = vsel %vm152, %v197, 0
    %224 = vmatprep.subr.bf16.mxu0 0
    %225 = vmatpush1.bf16.msra.mxu0 %v217
    %226 = vmatprep.subr.bf16.mxu0 0
    %227 = vmatpush1.bf16.msra.mxu0 %v218
    %228 = vmatprep.subr.bf16.mxu0 0
    %229 = vmatpush1.bf16.msra.mxu0 0
    %230 = vmatprep.subr.bf16.mxu0 0
    %231 = vmatpush1.bf16.msra.mxu0 0
    %232 = vmatprep.subr.bf16.mxu0 0
    %233 = vmatpush1.bf16.msra.mxu0 0
    %234 = vmatprep.subr.bf16.mxu0 0
    %235 = vmatpush1.bf16.msra.mxu0 0
    %236 = vmatprep.subr.bf16.mxu0 0
    %237 = vmatpush1.bf16.msra.mxu0 0
    %238 = vmatprep.subr.bf16.mxu0 0
    %239 = vmatpush1.bf16.msra.mxu0 0
    %240 = vmatprep.subr.bf16.mxu0 0
    %241 = vmatpush1.bf16.msra.mxu0 0
    %242 = vmatprep.subr.bf16.mxu0 0
    %243 = vmatpush1.bf16.msra.mxu0 0
    %244 = vmatprep.subr.bf16.mxu0 0
    %245 = vmatpush1.bf16.msra.mxu0 0
    %246 = vmatprep.subr.bf16.mxu0 0
    %247 = vmatpush1.bf16.msra.mxu0 0
    %248 = vmatprep.subr.bf16.mxu0 0
    %249 = vmatpush1.bf16.msra.mxu0 0
    %250 = vmatprep.subr.bf16.mxu0 0
    %251 = vmatpush1.bf16.msra.mxu0 0
    %252 = vmatprep.subr.bf16.mxu0 0
    %253 = vmatpush1.bf16.msra.mxu0 0
    %254 = vmatprep.subr.bf16.mxu0 0
    %255 = vmatpush1.bf16.msra.mxu0 0
    %256 = vmatprep.mubr.bf16.mxu0 0
    %257 = vmatmul.mubr.bf16.gmra.mrb[0].mxu0 %v222
    %v258 = vpop.f32.mrb[0].mxu0
    %v259 = vadd.f32 %v207, %v258
    %v260 = vpop.f32.mrb[0].mxu0
    %v261 = vpop.f32.mrb[0].mxu0
    %v262 = vpop.f32.mrb[0].mxu0
    %263 = vdwg.mxu0
    %v264 = vtanh.pop %v259
    %v265 = vmul.f32 %v264, 2.0
    %266 = vst [vmem:[#allocation8] sm:$0xff] %v265
    // Predicated region
    $region42: #{tpu_custom_call.1} parent=1 // pred_check
      _
    $region43: #{tpu_custom_call.1} parent=1 // pred_check_branch
      %268 = sbr.rel (0) target = $region45
    $region44: #{tpu_custom_call.1} parent=1 // pred_region
      %s270 = ssub.s32 128, 128
      %271 = vsyncadd [#allocation4], %s270
      %s273 = sshll.u32 [#allocation8], 4
      %s274 = int_to_ptr.vmem [resolvable:$true] %s273
      %276 = dma.vmem_to_hbm [thread:$0]  %s274, 128, %s7, [#allocation4]
    $region45: #{tpu_custom_call.1} parent=1 // pred_fallthru
      _
    // Predicated region
    $region46: #{tpu_custom_call.1} parent=1 // pred_check
      _
    $region47: #{tpu_custom_call.1} parent=1 // pred_check_branch
      %278 = sbr.rel (0) target = $region49
    $region48: #{tpu_custom_call.1} parent=1 // pred_region
      %279 = dma.done [#allocation4], 128
    $region49: #{tpu_custom_call.1} parent=1 // pred_fallthru
      _
    %280 = vsyncpa [#allocation3], 1
    %281 = vsyncpa [#allocation6], 1
    %282 = vsyncpa [#allocation4], 1

</llo_original>
